<compile_context>
chip_gen: v7x
topology: tpu7x:2x2x1
jax: 0.10.0
libtpu: 0.0.40
codegen_flags: <defaults>
</compile_context>

<pallas_src>
import jax
import jax.numpy as jnp
from jax.experimental import pallas as pl
from jax.experimental.pallas import tpu as pltpu

IN_FEATURES = 10
OUT_FEATURES = 1  # fixed by the module; the kernel below assumes 1.

# Below this batch size, XLA's fused dot+add beats any Pallas launch.
MIN_PALLAS_BATCH = 4096


def linear_kernel(x_ref, w_ref, b_ref, o_ref):
    # x_ref: [TB, IN]  (VMEM, pipelined batch tile)
    # w_ref: [1, IN]   (VMEM, grid-invariant weight row)
    # b_ref: [1]       (SMEM scalar bias)
    # o_ref: [TB, 1]   (VMEM output tile)
    x = x_ref[...]
    w = w_ref[...]                                  # (1, IN) broadcast row
    y = jnp.sum(x * w, axis=-1, keepdims=True)      # VPU mul + lane reduce
    o_ref[...] = (y + b_ref[0]).astype(o_ref.dtype)


def simple_model_forward(x, w_t, b, *, block_batch=512, force_pallas=False):
    """Equivalent of torch.nn.Linear(10, 1).forward(x).

    x:   [batch, IN_FEATURES]
    w_t: [IN_FEATURES, OUT_FEATURES]  (transposed vs PyTorch's [out, in])
    b:   [OUT_FEATURES]
    """
    batch = x.shape[0]
    assert x.shape[1] == IN_FEATURES
    assert w_t.shape == (IN_FEATURES, OUT_FEATURES)
    assert b.shape == (OUT_FEATURES,)
    assert OUT_FEATURES == 1

    if batch < MIN_PALLAS_BATCH and not force_pallas:
        # Tiny batch: dispatch overhead dominates; plain XLA is strictly faster.
        return x @ w_t + b[None, :]

    # Batch tile: multiple of 8 (f32 sublane) unless it equals the full batch.
    tb = min(block_batch, batch)
    if tb != batch and tb % 8 != 0:
        tb = max(8, (tb // 8) * 8)
    grid = (pl.cdiv(batch, tb),)

    # OUT_FEATURES == 1, so this reshape is exactly w_t.T laid out as one row.
    w_row = w_t.reshape(1, IN_FEATURES)

    return pl.pallas_call(
        linear_kernel,
        out_shape=jax.ShapeDtypeStruct((batch, OUT_FEATURES), x.dtype),
        grid_spec=pltpu.PrefetchScalarGridSpec(
            num_scalar_prefetch=0,
            grid=grid,
            in_specs=[
                # x: pipelined (double-buffered) batch tiles.
                pl.BlockSpec((tb, IN_FEATURES), lambda i: (i, 0)),
                # weight row: grid-invariant, stays resident in VMEM.
                pl.BlockSpec((1, IN_FEATURES), lambda i: (0, 0)),
                # bias: one f32 scalar, kept in SMEM (no padded VMEM tile/DMA).
                pl.BlockSpec(memory_space=pltpu.MemorySpace.SMEM),
            ],
            out_specs=pl.BlockSpec((tb, OUT_FEATURES), lambda i: (i, 0)),
        ),
        compiler_params=pltpu.CompilerParams(
            # Batch tiles are independent -> shardable across v7x's 2 TCs.
            dimension_semantics=("parallel",),
        ),
    )(x, w_row, b)


if __name__ == "__main__":
    key = jax.random.PRNGKey(0)
    k_x, k_w, k_b = jax.random.split(key, 3)

    # Deterministic parameter init mimicking torch.nn.Linear default:
    # uniform(-1/sqrt(in_features), 1/sqrt(in_features)), stored as [IN, OUT].
    bound = 1.0 / (IN_FEATURES ** 0.5)
    w_t = jax.random.uniform(
        k_w, (IN_FEATURES, OUT_FEATURES), dtype=jnp.float32,
        minval=-bound, maxval=bound)
    b = jax.random.uniform(
        k_b, (OUT_FEATURES,), dtype=jnp.float32, minval=-bound, maxval=bound)

    # 1) Pallas path: batch tiled into 2 blocks of 128 rows.
    batch = 256
    x = jax.random.normal(k_x, (batch, IN_FEATURES), dtype=jnp.float32)
    y = simple_model_forward(x, w_t, b, block_batch=128, force_pallas=True)
    jax.block_until_ready(y)
    y_ref = x @ w_t + b[None, :]
    assert y.shape == (batch, OUT_FEATURES)
    assert jnp.allclose(y, y_ref, atol=1e-5, rtol=1e-5)

    # 2) Pallas path with a ragged last tile (200 rows, 128-row blocks).
    x_rag = x[:200]
    y_rag = simple_model_forward(x_rag, w_t, b, block_batch=128,
                                 force_pallas=True)
    jax.block_until_ready(y_rag)
    assert jnp.allclose(y_rag, x_rag @ w_t + b[None, :], atol=1e-5, rtol=1e-5)

    # 3) Tiny-batch fallback path (plain XLA).
    x_small = x[:8]
    y_small = simple_model_forward(x_small, w_t, b)
    jax.block_until_ready(y_small)
    assert jnp.allclose(y_small, x_small @ w_t + b[None, :],
                        atol=1e-5, rtol=1e-5)

    print("KERNEL_OK")
</pallas_src>

<mosaic_0001>
module attributes {stable_mosaic.version = 11 : i64} {
  func.func @linear_kernel(%arg0: i32, %arg1: memref<128x10xf32, #tpu.memory_space<vmem>>, %arg2: memref<1x10xf32, #tpu.memory_space<vmem>>, %arg3: memref<1xf32, #tpu.memory_space<smem>>, %arg4: memref<128x1xf32, #tpu.memory_space<vmem>>) attributes {dimension_semantics = [#tpu.dimension_semantics<parallel>], iteration_bounds = array<i64: 2>, scalar_prefetch = 0 : i64, scratch_operands = 0 : i64, tpu.core_type = #tpu.core_type<tc>, window_params = [{transform_indices = @transform_0, window_bounds = array<i64: 128, 10>}, {pipeline_mode = #tpu.pipeline_mode<synchronous>, transform_indices = @transform_1, window_bounds = array<i64: 1, 10>}, {transform_indices = @transform_2, window_bounds = array<i64: 1>}, {transform_indices = @transform_3, window_bounds = array<i64: 128, 1>}]} {
    %c0 = arith.constant 0 : index
    %c0_0 = arith.constant 0 : index
    %0 = vector.load %arg1[%c0, %c0_0] : memref<128x10xf32, #tpu.memory_space<vmem>>, vector<128x10xf32>
    %c0_1 = arith.constant 0 : index
    %c0_2 = arith.constant 0 : index
    %1 = vector.load %arg2[%c0_1, %c0_2] : memref<1x10xf32, #tpu.memory_space<vmem>>, vector<1x10xf32>
    %2 = vector.broadcast %1 : vector<1x10xf32> to vector<128x10xf32>
    %3 = arith.mulf %0, %2 : vector<128x10xf32>
    %cst = arith.constant dense<0.000000e+00> : vector<128xf32>
    %4 = vector.multi_reduction <add>, %3, %cst [1] : vector<128x10xf32> to vector<128xf32>
    %5 = vector.shape_cast %4 : vector<128xf32> to vector<128x1xf32>
    %c0_3 = arith.constant 0 : index
    %6 = memref.load %arg3[%c0_3] : memref<1xf32, #tpu.memory_space<smem>>
    %7 = vector.broadcast %6 : f32 to vector<128x1xf32>
    %8 = arith.addf %5, %7 : vector<128x1xf32>
    %c0_4 = arith.constant 0 : index
    %c0_5 = arith.constant 0 : index
    %9 = vector.load %arg4[%c0_4, %c0_5] : memref<128x1xf32, #tpu.memory_space<vmem>>, vector<128x1xf32>
    tpu.vector_store %arg4[%c0_4, %c0_5], %8 {strides = array<i32>} : memref<128x1xf32, #tpu.memory_space<vmem>>, vector<128x1xf32>,
    return
  }
  func.func @transform_0(%arg0: i32) -> (i32, i32) {
    %c0_i32 = arith.constant 0 : i32
    %c0_i32_0 = arith.constant 0 : i32
    return %arg0, %c0_i32 : i32, i32
  }
  func.func @transform_1(%arg0: i32) -> (i32, i32) {
    %c0_i32 = arith.constant 0 : i32
    %c0_i32_0 = arith.constant 0 : i32
    %c0_i32_1 = arith.constant 0 : i32
    return %c0_i32, %c0_i32_0 : i32, i32
  }
  func.func @transform_2(%arg0: i32) -> i32 {
    %c0_i32 = arith.constant 0 : i32
    %c0_i32_0 = arith.constant 0 : i32
    return %c0_i32 : i32
  }
  func.func @transform_3(%arg0: i32) -> (i32, i32) {
    %c0_i32 = arith.constant 0 : i32
    %c0_i32_0 = arith.constant 0 : i32
    return %arg0, %c0_i32 : i32, i32
  }
}

</mosaic_0001>

<llo_original>
// kernel: tpu_custom_call.1
$region0: #{tpu_custom_call.1}
  #allocation0 [shape = 'u32[]', space=smem, size = 0x4, offset = 0x4, fixed_abs, tag = 'smem constant byte address 0x4 - core index']
  #allocation1 [shape = 'u32[144,128]{1,0:T(1,128)}', space=vmem, size = 0x12000, scoped, tag = 'internal scratch']
  #allocation2 [shape = 'f32[1]{0:T(128)S(6)}', space=smem, size = 0x200, scoped, tag = 'scoped memory for tpu_custom_call.1']
  %s0 = inlined_call_operand.vmem [shape: f32[256,10], index: 0, kind: input, shape index: {}]
  %s1 = inlined_call_operand.vmem [shape: f32[1,10], index: 1, kind: input, shape index: {}]
  %s2 = inlined_call_operand.<no memory space> [shape: f32[1], index: 2, kind: input, shape index: {}]
  %s3 = inlined_call_operand.vmem [shape: f32[256,1], index: 3, kind: output, shape index: {}]
  %s4 = sld [smem:[#allocation0]]
  $region45: #{tpu_custom_call.1} parent=0
    _
  %s6 = ssub.s32 1, %s4
  %s7 = scalar_select 0, %s6, %s4
  %8 = sst [smem:[#allocation2]] %s2
  loop: start=0, step=1, limit=4
  $region2: #{tpu_custom_call.1} parent=0 // loop_pre_header
    _
  $region3: #{tpu_custom_call.1} parent=0 // loop_header
    %s10 = sphi 0, %s14
    %p11 = scmp.ge.s32.totalorder %s10, 4
    %s20 = sphi 0, %s22
    %s23 = sphi 0, %s20
    %s24 = sphi 0, %s23
    %s40 = sphi 0, %s24
    %s44 = sphi 0, %s44
    %s46 = sphi 0, %s44
    %s47 = sphi 0, %s46
    %s61 = sphi 0, %s47
    %s65 = sphi 0, %s65
    %s67 = sphi 0, %s65
    %s68 = sphi 0, %s67
    %s82 = sphi 0, %s68
    %s88 = sphi 0, %s90
    %s91 = sphi 0, %s88
    %s92 = sphi 0, %s91
    %s108 = sphi 0, %s92
  $region4: #{tpu_custom_call.1} parent=0 // loop_header_branch
    %13 = sbr.rel (%p11) target = $region8
  $region5: #{tpu_custom_call.1} parent=0 // loop_body
    %s15 = ssub.s32 %s10, 1
    %s16 = ssub.s32 %s10, 2
    %s17 = sadd.s32 %s10, 1
    %s18 = ssub.s32 %s10, %s17
    %p19 = scmp.eq.s32.totalorder %s18, 0
    %s21 = sadd.s32 %s20, 1
    %s22 = scalar_select %p19, %s20, %s21
    %p25 = pneg %p19
    %p26 = scmp.eq.s32.totalorder %s10, 1
    %p27 = por %p25, %p26
    %p28 = scmp.ne.s32.totalorder %s20, %s23
    %p29 = scmp.eq.s32.totalorder %s10, 0
    %p30 = por %p28, %p29
    %p31 = scmp.ne.s32.totalorder %s20, %s23
    %p32 = scmp.eq.s32.totalorder %s15, 1
    %p33 = por %p31, %p32
    %p34 = scmp.ne.s32.totalorder %s23, %s24
    %p35 = scmp.eq.s32.totalorder %s15, 0
    %p36 = por %p34, %p35
    %p37 = scmp.ne.s32.totalorder %s23, %s24
    %p38 = scmp.eq.s32.totalorder %s16, 1
    %p39 = por %p37, %p38
    %p41 = scmp.ne.s32.totalorder %s24, %s40
    %p42 = scmp.eq.s32.totalorder %s16, 0
    %p43 = por %p41, %p42
    %s45 = sadd.s32 %s44, 1
    %p48 = scmp.eq.s32.totalorder %s10, 1
    %p49 = scmp.ne.s32.totalorder %s44, %s46
    %p50 = scmp.eq.s32.totalorder %s10, 0
    %p51 = por %p49, %p50
    %p52 = scmp.ne.s32.totalorder %s44, %s46
    %p53 = scmp.eq.s32.totalorder %s15, 1
    %p54 = por %p52, %p53
    %p55 = scmp.ne.s32.totalorder %s46, %s47
    %p56 = scmp.eq.s32.totalorder %s15, 0
    %p57 = por %p55, %p56
    %p58 = scmp.ne.s32.totalorder %s46, %s47
    %p59 = scmp.eq.s32.totalorder %s16, 1
    %p60 = por %p58, %p59
    %p62 = scmp.ne.s32.totalorder %s47, %s61
    %p63 = scmp.eq.s32.totalorder %s16, 0
    %p64 = por %p62, %p63
    %s66 = sadd.s32 %s65, 1
    %p69 = scmp.eq.s32.totalorder %s10, 1
    %p70 = scmp.ne.s32.totalorder %s65, %s67
    %p71 = scmp.eq.s32.totalorder %s10, 0
    %p72 = por %p70, %p71
    %p73 = scmp.ne.s32.totalorder %s65, %s67
    %p74 = scmp.eq.s32.totalorder %s15, 1
    %p75 = por %p73, %p74
    %p76 = scmp.ne.s32.totalorder %s67, %s68
    %p77 = scmp.eq.s32.totalorder %s15, 0
    %p78 = por %p76, %p77
    %p79 = scmp.ne.s32.totalorder %s67, %s68
    %p80 = scmp.eq.s32.totalorder %s16, 1
    %p81 = por %p79, %p80
    %p83 = scmp.ne.s32.totalorder %s68, %s82
    %p84 = scmp.eq.s32.totalorder %s16, 0
    %p85 = por %p83, %p84
    %s86 = ssub.s32 %s10, %s17
    %p87 = scmp.eq.s32.totalorder %s86, 0
    %s89 = sadd.s32 %s88, 1
    %s90 = scalar_select %p87, %s88, %s89
    %p93 = pneg %p87
    %p94 = scmp.eq.s32.totalorder %s10, 1
    %p95 = por %p93, %p94
    %p96 = scmp.ne.s32.totalorder %s88, %s91
    %p97 = scmp.eq.s32.totalorder %s10, 0
    %p98 = por %p96, %p97
    %p99 = scmp.ne.s32.totalorder %s88, %s91
    %p100 = scmp.eq.s32.totalorder %s15, 1
    %p101 = por %p99, %p100
    %p102 = scmp.ne.s32.totalorder %s91, %s92
    %p103 = scmp.eq.s32.totalorder %s15, 0
    %p104 = por %p102, %p103
    %p105 = scmp.ne.s32.totalorder %s91, %s92
    %p106 = scmp.eq.s32.totalorder %s16, 1
    %p107 = por %p105, %p106
    %p109 = scmp.ne.s32.totalorder %s92, %s108
    %p110 = scmp.eq.s32.totalorder %s16, 0
    %p111 = por %p109, %p110
    %p112 = scmp.le.s32.totalorder 1, %s10
    %p113 = scmp.lt.s32.totalorder %s10, 3
    %p114 = pnand %p112, %p113
    %p115 = pneg %p114
    // Predicated region
    $region9: #{tpu_custom_call.1} parent=5 // pred_check
      _
    $region10: #{tpu_custom_call.1} parent=5 // pred_check_branch
      %117 = sbr.rel (%p114) target = $region12
    $region11: #{tpu_custom_call.1} parent=5 // pred_region
      %s118 = ssub.s32 %s10, 1
      // Predicated region
      $region13: #{tpu_custom_call.1} parent=11 // pred_check
        %p119 = pneg %p57
      $region14: #{tpu_custom_call.1} parent=11 // pred_check_branch
        %121 = sbr.rel (%p119) target = $region16
      $region15: #{tpu_custom_call.1} parent=11 // pred_region
        _
      $region16: #{tpu_custom_call.1} parent=11 // pred_fallthru
        _
      // Predicated region
      $region17: #{tpu_custom_call.1} parent=11 // pred_check
        %p122 = pneg %p78
      $region18: #{tpu_custom_call.1} parent=11 // pred_check_branch
        %124 = sbr.rel (%p122) target = $region20
      $region19: #{tpu_custom_call.1} parent=11 // pred_region
        _
      $region20: #{tpu_custom_call.1} parent=11 // pred_fallthru
        _
    $region12: #{tpu_custom_call.1} parent=5 // pred_fallthru
      _
    %p125 = scmp.lt.s32.totalorder %s10, 2
    // Predicated region
    $region21: #{tpu_custom_call.1} parent=5 // pred_check
      %p126 = pneg %p125
    $region22: #{tpu_custom_call.1} parent=5 // pred_check_branch
      %128 = sbr.rel (%p126) target = $region24
    $region23: #{tpu_custom_call.1} parent=5 // pred_region
      // Predicated region
      $region25: #{tpu_custom_call.1} parent=23 // pred_check
        %p129 = pneg %p30
      $region26: #{tpu_custom_call.1} parent=23 // pred_check_branch
        %131 = sbr.rel (%p129) target = $region28
      $region27: #{tpu_custom_call.1} parent=23 // pred_region
        %s132 = smul.u32 16, %s10
        %p133 = scmp.lt.s32.totalorder %s132, 31
        %s134 = scalar_select %p133, %s132, 31
        %s135 = smul.addr %s134, 8
        %s136 = scalar_lea.vmem %s0, %s135
        %s137 = smul.u32 16, %s10
      $region28: #{tpu_custom_call.1} parent=23 // pred_fallthru
        _
    $region24: #{tpu_custom_call.1} parent=5 // pred_fallthru
      _
    %p138 = scmp.le.s32.totalorder 1, %s10
    %p139 = scmp.lt.s32.totalorder %s10, 3
    %p140 = pnand %p138, %p139
    %p141 = pneg %p140
    // Predicated region
    $region29: #{tpu_custom_call.1} parent=5 // pred_check
      _
    $region30: #{tpu_custom_call.1} parent=5 // pred_check_branch
      %143 = sbr.rel (%p140) target = $region32
    $region31: #{tpu_custom_call.1} parent=5 // pred_region
      %s144 = ssub.s32 %s10, 1
      %s145 = smul.u32 16, %s15
      %p146 = scmp.lt.s32.totalorder %s145, 31
      %s147 = scalar_select %p146, %s145, 31
      %s148 = smul.addr %s147, 8
      %s149 = scalar_lea.vmem %s0, %s148
      %p150 = pneg %p36
      %p151 = pneg %p33
      %p152 = pneg %p57
      %p153 = pneg %p54
      %p154 = pneg %p78
      %p155 = pneg %p75
      %p156 = pneg %p104
      %p157 = pneg %p101
      %s158 = smul.u32 16, %s15
      %p159 = scmp.lt.s32.totalorder %s158, 31
      %s160 = scalar_select %p159, %s158, 31
      %s161 = smul.addr %s160, 8
      %s162 = scalar_lea.vmem %s3, %s161
      %s163 = smul.u32 16, %s15
      %p164 = scmp.lt.s32.totalorder %s163, 31
      %s165 = scalar_select %p164, %s163, 31
      %s166 = smul.addr %s165, 8
      %s167 = scalar_lea.vmem %s0, %s166
      %s168 = smul.u32 16, %s15
      %s169 = smul.u32 16, %s15
      %p170 = scmp.lt.s32.totalorder %s169, 31
      %s171 = scalar_select %p170, %s169, 31
      %s172 = smul.addr %s171, 8
      %s173 = scalar_lea.vmem %s3, %s172
      %s174 = smul.u32 16, %s15
      %v175 = vld [vmem:[%s167] sm:$0xff]
      %v176 = vld [vmem:[%s167 + $0x8] sm:$0xff]
      %v177 = vld [vmem:[%s167 + $0x10] sm:$0xff]
      %v178 = vld [vmem:[%s167 + $0x18] sm:$0xff]
      %v179 = vld [vmem:[%s167 + $0x20] sm:$0xff]
      %v180 = vld [vmem:[%s167 + $0x28] sm:$0xff]
      %v181 = vld [vmem:[%s167 + $0x30] sm:$0xff]
      %v182 = vld [vmem:[%s167 + $0x38] sm:$0xff]
      %v183 = vld [vmem:[%s167 + $0x40] sm:$0xff]
      %v184 = vld [vmem:[%s167 + $0x48] sm:$0xff]
      %v185 = vld [vmem:[%s167 + $0x50] sm:$0xff]
      %v186 = vld [vmem:[%s167 + $0x58] sm:$0xff]
      %v187 = vld [vmem:[%s167 + $0x60] sm:$0xff]
      %v188 = vld [vmem:[%s167 + $0x68] sm:$0xff]
      %v189 = vld [vmem:[%s167 + $0x70] sm:$0xff]
      %v190 = vld [vmem:[%s167 + $0x78] sm:$0xff]
      %v191 = vld [vmem:[%s1] sm:$0x1]
      %v193 = vlaneseq
      %v194 = vshrl.u32 %v193, 7
      %v195 = vsub.s32 0, %v194
      %v196 = vrot.slane %v191, %v195
      %v198 = vmul.f32 %v175, %v196
      %v199 = vmul.f32 %v176, %v196
      %v200 = vmul.f32 %v177, %v196
      %v201 = vmul.f32 %v178, %v196
      %v202 = vmul.f32 %v179, %v196
      %v203 = vmul.f32 %v180, %v196
      %v204 = vmul.f32 %v181, %v196
      %v205 = vmul.f32 %v182, %v196
      %v206 = vmul.f32 %v183, %v196
      %v207 = vmul.f32 %v184, %v196
      %v208 = vmul.f32 %v185, %v196
      %v209 = vmul.f32 %v186, %v196
      %v210 = vmul.f32 %v187, %v196
      %v211 = vmul.f32 %v188, %v196
      %v212 = vmul.f32 %v189, %v196
      %v213 = vmul.f32 %v190, %v196
      %vm214 = vcmask 80896
      %v215 = vsel %vm214, %v198, 0.0
      %216 = vadd.xlane.f32.xlu0 %v215
      %v217 = vpop.xlane.xlu0 %216
      %v218 = vsel %vm214, %v199, 0.0
      %219 = vadd.xlane.f32.xlu0 %v218
      %v220 = vpop.xlane.xlu0 %219
      %v221 = vsel %vm214, %v200, 0.0
      %222 = vadd.xlane.f32.xlu0 %v221
      %v223 = vpop.xlane.xlu0 %222
      %v224 = vsel %vm214, %v201, 0.0
      %225 = vadd.xlane.f32.xlu0 %v224
      %v226 = vpop.xlane.xlu0 %225
      %v227 = vsel %vm214, %v202, 0.0
      %228 = vadd.xlane.f32.xlu0 %v227
      %v229 = vpop.xlane.xlu0 %228
      %v230 = vsel %vm214, %v203, 0.0
      %231 = vadd.xlane.f32.xlu0 %v230
      %v232 = vpop.xlane.xlu0 %231
      %v233 = vsel %vm214, %v204, 0.0
      %234 = vadd.xlane.f32.xlu0 %v233
      %v235 = vpop.xlane.xlu0 %234
      %v236 = vsel %vm214, %v205, 0.0
      %237 = vadd.xlane.f32.xlu0 %v236
      %v238 = vpop.xlane.xlu0 %237
      %v239 = vsel %vm214, %v206, 0.0
      %240 = vadd.xlane.f32.xlu0 %v239
      %v241 = vpop.xlane.xlu0 %240
      %v242 = vsel %vm214, %v207, 0.0
      %243 = vadd.xlane.f32.xlu0 %v242
      %v244 = vpop.xlane.xlu0 %243
      %v245 = vsel %vm214, %v208, 0.0
      %246 = vadd.xlane.f32.xlu0 %v245
      %v247 = vpop.xlane.xlu0 %246
      %v248 = vsel %vm214, %v209, 0.0
      %249 = vadd.xlane.f32.xlu0 %v248
      %v250 = vpop.xlane.xlu0 %249
      %v251 = vsel %vm214, %v210, 0.0
      %252 = vadd.xlane.f32.xlu0 %v251
      %v253 = vpop.xlane.xlu0 %252
      %v254 = vsel %vm214, %v211, 0.0
      %255 = vadd.xlane.f32.xlu0 %v254
      %v256 = vpop.xlane.xlu0 %255
      %v257 = vsel %vm214, %v212, 0.0
      %258 = vadd.xlane.f32.xlu0 %v257
      %v259 = vpop.xlane.xlu0 %258
      %v260 = vsel %vm214, %v213, 0.0
      %261 = vadd.xlane.f32.xlu0 %v260
      %v262 = vpop.xlane.xlu0 %261
      %s263 = sld [smem:[#allocation2]]
      %v264 = vstv %s263
      %v265 = vadd.f32 %v217, %v264
      %v266 = vadd.f32 %v220, %v264
      %v267 = vadd.f32 %v223, %v264
      %v268 = vadd.f32 %v226, %v264
      %v269 = vadd.f32 %v229, %v264
      %v270 = vadd.f32 %v232, %v264
      %v271 = vadd.f32 %v235, %v264
      %v272 = vadd.f32 %v238, %v264
      %v273 = vadd.f32 %v241, %v264
      %v274 = vadd.f32 %v244, %v264
      %v275 = vadd.f32 %v247, %v264
      %v276 = vadd.f32 %v250, %v264
      %v277 = vadd.f32 %v253, %v264
      %v278 = vadd.f32 %v256, %v264
      %v279 = vadd.f32 %v259, %v264
      %v280 = vadd.f32 %v262, %v264
      %vm281 = vcmask 7168
      %282 = vst.msk [vmem:[%s173] sm:$0xff] %vm281, %v265
      %283 = vst.msk [vmem:[%s173 + $0x8] sm:$0xff] %vm281, %v266
      %284 = vst.msk [vmem:[%s173 + $0x10] sm:$0xff] %vm281, %v267
      %285 = vst.msk [vmem:[%s173 + $0x18] sm:$0xff] %vm281, %v268
      %286 = vst.msk [vmem:[%s173 + $0x20] sm:$0xff] %vm281, %v269
      %287 = vst.msk [vmem:[%s173 + $0x28] sm:$0xff] %vm281, %v270
      %288 = vst.msk [vmem:[%s173 + $0x30] sm:$0xff] %vm281, %v271
      %289 = vst.msk [vmem:[%s173 + $0x38] sm:$0xff] %vm281, %v272
      %290 = vst.msk [vmem:[%s173 + $0x40] sm:$0xff] %vm281, %v273
      %291 = vst.msk [vmem:[%s173 + $0x48] sm:$0xff] %vm281, %v274
      %292 = vst.msk [vmem:[%s173 + $0x50] sm:$0xff] %vm281, %v275
      %293 = vst.msk [vmem:[%s173 + $0x58] sm:$0xff] %vm281, %v276
      %294 = vst.msk [vmem:[%s173 + $0x60] sm:$0xff] %vm281, %v277
      %295 = vst.msk [vmem:[%s173 + $0x68] sm:$0xff] %vm281, %v278
      %296 = vst.msk [vmem:[%s173 + $0x70] sm:$0xff] %vm281, %v279
      %297 = vst.msk [vmem:[%s173 + $0x78] sm:$0xff] %vm281, %v280
      %s298 = smul.u32 16, %s15
      %p299 = scmp.lt.s32.totalorder %s298, 31
      %s300 = scalar_select %p299, %s298, 31
      %s301 = smul.addr %s300, 8
      %s302 = scalar_lea.vmem %s3, %s301
      // Predicated region
      $region33: #{tpu_custom_call.1} parent=31 // pred_check
        %p303 = pneg %p101
      $region34: #{tpu_custom_call.1} parent=31 // pred_check_branch
        %305 = sbr.rel (%p303) target = $region36
      $region35: #{tpu_custom_call.1} parent=31 // pred_region
        %s306 = smul.u32 16, %s15
      $region36: #{tpu_custom_call.1} parent=31 // pred_fallthru
        _
    $region32: #{tpu_custom_call.1} parent=5 // pred_fallthru
      _
    %p307 = scmp.le.s32.totalorder 2, %s10
    // Predicated region
    $region37: #{tpu_custom_call.1} parent=5 // pred_check
      %p308 = pneg %p307
    $region38: #{tpu_custom_call.1} parent=5 // pred_check_branch
      %310 = sbr.rel (%p308) target = $region40
    $region39: #{tpu_custom_call.1} parent=5 // pred_region
      %s311 = ssub.s32 %s10, 2
      // Predicated region
      $region41: #{tpu_custom_call.1} parent=39 // pred_check
        %p312 = pneg %p107
      $region42: #{tpu_custom_call.1} parent=39 // pred_check_branch
        %314 = sbr.rel (%p312) target = $region44
      $region43: #{tpu_custom_call.1} parent=39 // pred_region
        %s315 = smul.u32 16, %s16
        %p316 = scmp.lt.s32.totalorder %s315, 31
        %s317 = scalar_select %p316, %s315, 31
        %s318 = smul.addr %s317, 8
        %s319 = scalar_lea.vmem %s3, %s318
      $region44: #{tpu_custom_call.1} parent=39 // pred_fallthru
        _
    $region40: #{tpu_custom_call.1} parent=5 // pred_fallthru
      _
  $region6: #{tpu_custom_call.1} parent=0 // loop_footer
    %s14 = sadd.s32 1, %s10
  $region7: #{tpu_custom_call.1} parent=0 // loop_footer_branch
    %9 = sbr.rel target = $region3
  $region8: #{tpu_custom_call.1} parent=0 // loop_exit
    _

</llo_original>
